<compile_context>
chip_gen: v5e
topology: v5e:2x2
jax: 0.10.0
libtpu: 0.0.40
codegen_flags: <defaults>
</compile_context>

<pallas_src>
import functools

import jax
import jax.numpy as jnp
import numpy as np
from jax import lax
from jax.experimental import pallas as pl
from jax.experimental.pallas import tpu as pltpu


def _conv1x1(w, b, x, use_mxu):
    """1x1 conv = channel matmul.  w: (out_ch, in_ch), b: (out_ch, 1), x: (in_ch, HW)."""
    if use_mxu:
        # Large K: bf16 MXU operands, f32 accumulation (v6e/v7x native; fine on v5e MXU).
        y = jnp.dot(w.astype(jnp.bfloat16), x.astype(jnp.bfloat16),
                    preferred_element_type=jnp.float32)
    else:
        # Tiny K (4 / 8 here): VPU broadcast-MACs, no MXU result-FIFO latency.
        in_ch = w.shape[1]
        y = w[:, 0:1] * x[0:1, :]
        for c in range(1, in_ch):
            y = y + w[:, c:c + 1] * x[c:c + 1, :]
    return y + b


def ffn_kernel(x_ref, mask_ref, w1_ref, b1_ref, wdw_ref, bdw_ref, w2_ref, b2_ref,
               o_ref, *, W, mxu_min_k):
    # x_ref:   (bb, C_in, H*W)   bb batch elements per grid step (lanes = H*W)
    # mask_ref:(9, H*W)          precomputed border-validity mask per 3x3 tap
    # w1_ref:  (hidden, C_in)    fc1 1x1 conv weight, PyTorch (out_ch, in_ch)
    # b1_ref:  (hidden, 1)
    # wdw_ref: (hidden, 9)       depthwise 3x3 taps, row-major k = ky*3 + kx
    # bdw_ref: (hidden, 1)
    # w2_ref:  (C_out, hidden)   fc2 1x1 conv weight
    # b2_ref:  (C_out, 1)
    # o_ref:   (bb, C_out, H*W)
    bb, c_in, HW = x_ref.shape
    hidden = w1_ref.shape[0]

    # Constant operands: loaded once per grid step, reused for all bb batch elements.
    w1 = w1_ref[...].astype(jnp.float32)
    b1 = b1_ref[...].astype(jnp.float32)
    wdw = wdw_ref[...].astype(jnp.float32)
    bdw = bdw_ref[...].astype(jnp.float32)
    w2 = w2_ref[...].astype(jnp.float32)
    b2 = b2_ref[...].astype(jnp.float32)
    masks = mask_ref[...]                                    # (9, HW) f32

    for b in range(bb):                                      # unrolled batch loop
        x = x_ref[b].astype(jnp.float32)                     # (C_in, HW)

        # fc1 (1x1 conv + bias)
        h = _conv1x1(w1, b1, x, c_in >= mxu_min_k)           # (hidden, HW)

        # Depthwise 3x3, stride 1, zero padding 1: in-register XLU lane rolls,
        # masked with precomputed per-tap border masks (all f32, v5e-safe VPU math).
        acc = h * wdw[:, 4:5]                                # center tap (dy=dx=0)
        for k in (0, 1, 2, 3, 5, 6, 7, 8):                   # 8 shifted taps, unrolled
            dy, dx = k // 3 - 1, k % 3 - 1
            shift = dy * W + dx                              # flat-index offset
            shifted = pltpu.roll(h, shift=(-shift) % HW, axis=1)
            acc = acc + (shifted * masks[k:k + 1, :]) * wdw[:, k:k + 1]
        acc = acc + bdw                                      # (hidden, 1) broadcast

        # ReLU (dropout p=0.0 -> identity)
        h2 = jnp.maximum(acc, 0.0)

        # fc2 (1x1 conv + bias); output stays lane-dense as (C_out, HW).
        out = _conv1x1(w2, b2, h2, hidden >= mxu_min_k)
        o_ref[b] = out.astype(o_ref.dtype)


def _border_masks(H, W):
    """(9, H*W) float32 validity masks: masks[k, n] == 1 iff 3x3 tap k at flat
    position n reads an in-bounds pixel (k = (dy+1)*3 + (dx+1)).  Built on the host
    so the kernel's tap loop has no compares and no vector integer div/mod."""
    row = np.arange(H * W, dtype=np.int64) // W
    col = np.arange(H * W, dtype=np.int64) % W
    masks = np.ones((9, H * W), dtype=np.float32)
    for k in range(9):
        dy, dx = k // 3 - 1, k % 3 - 1
        valid = np.ones(H * W, dtype=bool)
        if dy == -1:
            valid &= row >= 1
        if dy == 1:
            valid &= row <= H - 2
        if dx == -1:
            valid &= col >= 1
        if dx == 1:
            valid &= col <= W - 2
        masks[k] = valid.astype(np.float32)
    return jnp.asarray(masks)


def ffn_pallas_nchw(x_nchw, params, *, batch_block=None, mxu_min_k=128):
    """FFN forward on NCHW input; returns NCHW output (PyTorch semantics)."""
    w1, b1, wdw, bdw, w2, b2 = params
    B, C_in, H, W = x_nchw.shape
    hidden = w1.shape[0]
    C_out = w2.shape[0]
    HW = H * W

    # --- batch merging: amortize the ~0.35us/step grid overhead ----------------
    # Rough per-batch-element VMEM footprint (f32 in/out blocks + intermediates).
    bytes_per_batch = 4 * HW * (C_in + C_out + 3 * hidden)
    if batch_block is None:
        if B >= 4 and B % 2 == 0:
            batch_block = B // 2        # 2 parallel steps -> both v7x TCs stay busy
        else:
            batch_block = B             # tiny B: one fully merged step (v5e/v6e optimal)
    # Cap so merged blocks stay well inside scoped VMEM, then force divisibility.
    batch_block = min(batch_block, max(1, (8 << 20) // max(1, bytes_per_batch)))
    while B % batch_block:
        batch_block -= 1
    num_steps = B // batch_block

    # Free (contiguous) reshapes only -- no HBM relayout passes.
    x_flat = x_nchw.reshape(B, C_in, HW)
    wdw9 = wdw.reshape(hidden, 9)
    b1c = b1.reshape(hidden, 1)
    bdwc = bdw.reshape(hidden, 1)
    b2c = b2.reshape(C_out, 1)
    masks = _border_masks(H, W)         # compile-time constant, (9, HW)

    # Scoped-VMEM limit sized from the blocks; cap below v7x's 64 MiB physical VMEM.
    vmem_limit = int(min(48 << 20, max(16 << 20, 4 * batch_block * bytes_per_batch)))

    grid_spec = pltpu.PrefetchScalarGridSpec(
        num_scalar_prefetch=0,
        grid=(num_steps,),
        in_specs=[
            pl.BlockSpec((batch_block, C_in, HW), lambda i: (i, 0, 0)),
            pl.BlockSpec((9, HW), lambda i: (0, 0)),
            pl.BlockSpec((hidden, C_in), lambda i: (0, 0)),
            pl.BlockSpec((hidden, 1), lambda i: (0, 0)),
            pl.BlockSpec((hidden, 9), lambda i: (0, 0)),
            pl.BlockSpec((hidden, 1), lambda i: (0, 0)),
            pl.BlockSpec((C_out, hidden), lambda i: (0, 0)),
            pl.BlockSpec((C_out, 1), lambda i: (0, 0)),
        ],
        out_specs=pl.BlockSpec((batch_block, C_out, HW), lambda i: (i, 0, 0)),
    )
    y_flat = pl.pallas_call(
        functools.partial(ffn_kernel, W=W, mxu_min_k=mxu_min_k),
        out_shape=jax.ShapeDtypeStruct((B, C_out, HW), x_nchw.dtype),
        grid_spec=grid_spec,
        compiler_params=pltpu.CompilerParams(
            dimension_semantics=("parallel",),
            vmem_limit_bytes=vmem_limit),
    )(x_flat, masks, w1, b1c, wdw9, bdwc, w2, b2c)
    return y_flat.reshape(B, C_out, H, W)


def ffn_ref_nchw(x, params):
    """Pure-JAX reference with lax.conv (matches PyTorch semantics, NCHW)."""
    w1, b1, wdw, bdw, w2, b2 = params
    hidden = w1.shape[0]
    dn = ("NCHW", "OIHW", "NCHW")
    h = lax.conv_general_dilated(x, w1[:, :, None, None], (1, 1), "VALID",
                                 dimension_numbers=dn)
    h = h + b1.reshape(1, -1, 1, 1)
    h = lax.conv_general_dilated(h, wdw[:, None, :, :], (1, 1),
                                 ((1, 1), (1, 1)), dimension_numbers=dn,
                                 feature_group_count=hidden)
    h = h + bdw.reshape(1, -1, 1, 1)
    h = jnp.maximum(h, 0.0)
    y = lax.conv_general_dilated(h, w2[:, :, None, None], (1, 1), "VALID",
                                 dimension_numbers=dn)
    y = y + b2.reshape(1, -1, 1, 1)
    return y


def init_params(key, c_in, hidden, c_out):
    k1, k2, k3, k4, k5, k6 = jax.random.split(key, 6)
    w1 = jax.random.normal(k1, (hidden, c_in), jnp.float32) * 0.1   # fc1 (out, in)
    b1 = jax.random.normal(k2, (hidden,), jnp.float32) * 0.1
    wdw = jax.random.normal(k3, (hidden, 3, 3), jnp.float32) * 0.1  # depthwise (ch, 3, 3)
    bdw = jax.random.normal(k4, (hidden,), jnp.float32) * 0.1
    w2 = jax.random.normal(k5, (c_out, hidden), jnp.float32) * 0.1  # fc2 (out, in)
    b2 = jax.random.normal(k6, (c_out,), jnp.float32) * 0.1
    return w1, b1, wdw, bdw, w2, b2


if __name__ == "__main__":
    B, C_IN, H, W = 2, 4, 16, 16
    HIDDEN, C_OUT = 8, 4

    key = jax.random.PRNGKey(0)
    kx, kp = jax.random.split(key)
    x = jax.random.normal(kx, (B, C_IN, H, W), jnp.float32)   # NCHW like PyTorch
    params = init_params(kp, C_IN, HIDDEN, C_OUT)

    y = jax.block_until_ready(ffn_pallas_nchw(x, params))
    y_ref = jax.block_until_ready(ffn_ref_nchw(x, params))
    np.testing.assert_allclose(np.asarray(y), np.asarray(y_ref),
                               rtol=1e-3, atol=1e-3)
    print("KERNEL_OK")
</pallas_src>

<mosaic_0001>
module attributes {stable_mosaic.version = 11 : i64} {
  func.func @ffn_kernel(%arg0: i32, %arg1: memref<2x4x256xf32, #tpu.memory_space<vmem>>, %arg2: memref<9x256xf32, #tpu.memory_space<vmem>>, %arg3: memref<8x4xf32, #tpu.memory_space<vmem>>, %arg4: memref<8x1xf32, #tpu.memory_space<vmem>>, %arg5: memref<8x9xf32, #tpu.memory_space<vmem>>, %arg6: memref<8x1xf32, #tpu.memory_space<vmem>>, %arg7: memref<4x8xf32, #tpu.memory_space<vmem>>, %arg8: memref<4x1xf32, #tpu.memory_space<vmem>>, %arg9: memref<2x4x256xf32, #tpu.memory_space<vmem>>) attributes {dimension_semantics = [#tpu.dimension_semantics<parallel>], iteration_bounds = array<i64: 1>, scalar_prefetch = 0 : i64, scratch_operands = 0 : i64, tpu.core_type = #tpu.core_type<tc>, window_params = [{transform_indices = @transform_0, window_bounds = array<i64: 2, 4, 256>}, {pipeline_mode = #tpu.pipeline_mode<synchronous>, transform_indices = @transform_1, window_bounds = array<i64: 9, 256>}, {pipeline_mode = #tpu.pipeline_mode<synchronous>, transform_indices = @transform_2, window_bounds = array<i64: 8, 4>}, {pipeline_mode = #tpu.pipeline_mode<synchronous>, transform_indices = @transform_3, window_bounds = array<i64: 8, 1>}, {pipeline_mode = #tpu.pipeline_mode<synchronous>, transform_indices = @transform_4, window_bounds = array<i64: 8, 9>}, {pipeline_mode = #tpu.pipeline_mode<synchronous>, transform_indices = @transform_5, window_bounds = array<i64: 8, 1>}, {pipeline_mode = #tpu.pipeline_mode<synchronous>, transform_indices = @transform_6, window_bounds = array<i64: 4, 8>}, {pipeline_mode = #tpu.pipeline_mode<synchronous>, transform_indices = @transform_7, window_bounds = array<i64: 4, 1>}, {transform_indices = @transform_8, window_bounds = array<i64: 2, 4, 256>}]} {
    %c0 = arith.constant 0 : index
    %c0_0 = arith.constant 0 : index
    %0 = vector.load %arg3[%c0, %c0_0] : memref<8x4xf32, #tpu.memory_space<vmem>>, vector<8x4xf32>
    %c0_1 = arith.constant 0 : index
    %c0_2 = arith.constant 0 : index
    %1 = vector.load %arg4[%c0_1, %c0_2] : memref<8x1xf32, #tpu.memory_space<vmem>>, vector<8x1xf32>
    %c0_3 = arith.constant 0 : index
    %c0_4 = arith.constant 0 : index
    %2 = vector.load %arg5[%c0_3, %c0_4] : memref<8x9xf32, #tpu.memory_space<vmem>>, vector<8x9xf32>
    %c0_5 = arith.constant 0 : index
    %c0_6 = arith.constant 0 : index
    %3 = vector.load %arg6[%c0_5, %c0_6] : memref<8x1xf32, #tpu.memory_space<vmem>>, vector<8x1xf32>
    %c0_7 = arith.constant 0 : index
    %c0_8 = arith.constant 0 : index
    %4 = vector.load %arg7[%c0_7, %c0_8] : memref<4x8xf32, #tpu.memory_space<vmem>>, vector<4x8xf32>
    %c0_9 = arith.constant 0 : index
    %c0_10 = arith.constant 0 : index
    %5 = vector.load %arg8[%c0_9, %c0_10] : memref<4x1xf32, #tpu.memory_space<vmem>>, vector<4x1xf32>
    %c0_11 = arith.constant 0 : index
    %c0_12 = arith.constant 0 : index
    %6 = vector.load %arg2[%c0_11, %c0_12] : memref<9x256xf32, #tpu.memory_space<vmem>>, vector<9x256xf32>
    %c0_13 = arith.constant 0 : index
    %c0_14 = arith.constant 0 : index
    %c0_15 = arith.constant 0 : index
    %7 = vector.load %arg1[%c0_13, %c0_14, %c0_15] : memref<2x4x256xf32, #tpu.memory_space<vmem>>, vector<1x4x256xf32>
    %8 = vector.shape_cast %7 : vector<1x4x256xf32> to vector<4x256xf32>
    %9 = vector.extract_strided_slice %0 {offsets = [0, 0], sizes = [8, 1], strides = [1, 1]} : vector<8x4xf32> to vector<8x1xf32>
    %10 = vector.extract_strided_slice %8 {offsets = [0, 0], sizes = [1, 256], strides = [1, 1]} : vector<4x256xf32> to vector<1x256xf32>
    %11 = vector.broadcast %9 : vector<8x1xf32> to vector<8x256xf32>
    %12 = vector.broadcast %10 : vector<1x256xf32> to vector<8x256xf32>
    %13 = arith.mulf %11, %12 : vector<8x256xf32>
    %14 = vector.extract_strided_slice %0 {offsets = [0, 1], sizes = [8, 1], strides = [1, 1]} : vector<8x4xf32> to vector<8x1xf32>
    %15 = vector.extract_strided_slice %8 {offsets = [1, 0], sizes = [1, 256], strides = [1, 1]} : vector<4x256xf32> to vector<1x256xf32>
    %16 = vector.broadcast %14 : vector<8x1xf32> to vector<8x256xf32>
    %17 = vector.broadcast %15 : vector<1x256xf32> to vector<8x256xf32>
    %18 = arith.mulf %16, %17 : vector<8x256xf32>
    %19 = arith.addf %13, %18 : vector<8x256xf32>
    %20 = vector.extract_strided_slice %0 {offsets = [0, 2], sizes = [8, 1], strides = [1, 1]} : vector<8x4xf32> to vector<8x1xf32>
    %21 = vector.extract_strided_slice %8 {offsets = [2, 0], sizes = [1, 256], strides = [1, 1]} : vector<4x256xf32> to vector<1x256xf32>
    %22 = vector.broadcast %20 : vector<8x1xf32> to vector<8x256xf32>
    %23 = vector.broadcast %21 : vector<1x256xf32> to vector<8x256xf32>
    %24 = arith.mulf %22, %23 : vector<8x256xf32>
    %25 = arith.addf %19, %24 : vector<8x256xf32>
    %26 = vector.extract_strided_slice %0 {offsets = [0, 3], sizes = [8, 1], strides = [1, 1]} : vector<8x4xf32> to vector<8x1xf32>
    %27 = vector.extract_strided_slice %8 {offsets = [3, 0], sizes = [1, 256], strides = [1, 1]} : vector<4x256xf32> to vector<1x256xf32>
    %28 = vector.broadcast %26 : vector<8x1xf32> to vector<8x256xf32>
    %29 = vector.broadcast %27 : vector<1x256xf32> to vector<8x256xf32>
    %30 = arith.mulf %28, %29 : vector<8x256xf32>
    %31 = arith.addf %25, %30 : vector<8x256xf32>
    %32 = vector.broadcast %1 : vector<8x1xf32> to vector<8x256xf32>
    %33 = arith.addf %31, %32 : vector<8x256xf32>
    %34 = vector.extract_strided_slice %2 {offsets = [0, 4], sizes = [8, 1], strides = [1, 1]} : vector<8x9xf32> to vector<8x1xf32>
    %35 = vector.broadcast %34 : vector<8x1xf32> to vector<8x256xf32>
    %36 = arith.mulf %33, %35 : vector<8x256xf32>
    %c17_i32 = arith.constant 17 : i32
    %37 = tpu.dynamic_rotate %33 by %c17_i32 dim 1 : vector<8x256xf32>, i32 -> vector<8x256xf32>
    %38 = vector.extract_strided_slice %6 {offsets = [0, 0], sizes = [1, 256], strides = [1, 1]} : vector<9x256xf32> to vector<1x256xf32>
    %39 = vector.broadcast %38 : vector<1x256xf32> to vector<8x256xf32>
    %40 = arith.mulf %37, %39 : vector<8x256xf32>
    %41 = vector.extract_strided_slice %2 {offsets = [0, 0], sizes = [8, 1], strides = [1, 1]} : vector<8x9xf32> to vector<8x1xf32>
    %42 = vector.broadcast %41 : vector<8x1xf32> to vector<8x256xf32>
    %43 = arith.mulf %40, %42 : vector<8x256xf32>
    %44 = arith.addf %36, %43 : vector<8x256xf32>
    %c16_i32 = arith.constant 16 : i32
    %45 = tpu.dynamic_rotate %33 by %c16_i32 dim 1 : vector<8x256xf32>, i32 -> vector<8x256xf32>
    %46 = vector.extract_strided_slice %6 {offsets = [1, 0], sizes = [1, 256], strides = [1, 1]} : vector<9x256xf32> to vector<1x256xf32>
    %47 = vector.broadcast %46 : vector<1x256xf32> to vector<8x256xf32>
    %48 = arith.mulf %45, %47 : vector<8x256xf32>
    %49 = vector.extract_strided_slice %2 {offsets = [0, 1], sizes = [8, 1], strides = [1, 1]} : vector<8x9xf32> to vector<8x1xf32>
    %50 = vector.broadcast %49 : vector<8x1xf32> to vector<8x256xf32>
    %51 = arith.mulf %48, %50 : vector<8x256xf32>
    %52 = arith.addf %44, %51 : vector<8x256xf32>
    %c15_i32 = arith.constant 15 : i32
    %53 = tpu.dynamic_rotate %33 by %c15_i32 dim 1 : vector<8x256xf32>, i32 -> vector<8x256xf32>
    %54 = vector.extract_strided_slice %6 {offsets = [2, 0], sizes = [1, 256], strides = [1, 1]} : vector<9x256xf32> to vector<1x256xf32>
    %55 = vector.broadcast %54 : vector<1x256xf32> to vector<8x256xf32>
    %56 = arith.mulf %53, %55 : vector<8x256xf32>
    %57 = vector.extract_strided_slice %2 {offsets = [0, 2], sizes = [8, 1], strides = [1, 1]} : vector<8x9xf32> to vector<8x1xf32>
    %58 = vector.broadcast %57 : vector<8x1xf32> to vector<8x256xf32>
    %59 = arith.mulf %56, %58 : vector<8x256xf32>
    %60 = arith.addf %52, %59 : vector<8x256xf32>
    %c1_i32 = arith.constant 1 : i32
    %61 = tpu.dynamic_rotate %33 by %c1_i32 dim 1 : vector<8x256xf32>, i32 -> vector<8x256xf32>
    %62 = vector.extract_strided_slice %6 {offsets = [3, 0], sizes = [1, 256], strides = [1, 1]} : vector<9x256xf32> to vector<1x256xf32>
    %63 = vector.broadcast %62 : vector<1x256xf32> to vector<8x256xf32>
    %64 = arith.mulf %61, %63 : vector<8x256xf32>
    %65 = vector.extract_strided_slice %2 {offsets = [0, 3], sizes = [8, 1], strides = [1, 1]} : vector<8x9xf32> to vector<8x1xf32>
    %66 = vector.broadcast %65 : vector<8x1xf32> to vector<8x256xf32>
    %67 = arith.mulf %64, %66 : vector<8x256xf32>
    %68 = arith.addf %60, %67 : vector<8x256xf32>
    %c255_i32 = arith.constant 255 : i32
    %69 = tpu.dynamic_rotate %33 by %c255_i32 dim 1 : vector<8x256xf32>, i32 -> vector<8x256xf32>
    %70 = vector.extract_strided_slice %6 {offsets = [5, 0], sizes = [1, 256], strides = [1, 1]} : vector<9x256xf32> to vector<1x256xf32>
    %71 = vector.broadcast %70 : vector<1x256xf32> to vector<8x256xf32>
    %72 = arith.mulf %69, %71 : vector<8x256xf32>
    %73 = vector.extract_strided_slice %2 {offsets = [0, 5], sizes = [8, 1], strides = [1, 1]} : vector<8x9xf32> to vector<8x1xf32>
    %74 = vector.broadcast %73 : vector<8x1xf32> to vector<8x256xf32>
    %75 = arith.mulf %72, %74 : vector<8x256xf32>
    %76 = arith.addf %68, %75 : vector<8x256xf32>
    %c241_i32 = arith.constant 241 : i32
    %77 = tpu.dynamic_rotate %33 by %c241_i32 dim 1 : vector<8x256xf32>, i32 -> vector<8x256xf32>
    %78 = vector.extract_strided_slice %6 {offsets = [6, 0], sizes = [1, 256], strides = [1, 1]} : vector<9x256xf32> to vector<1x256xf32>
    %79 = vector.broadcast %78 : vector<1x256xf32> to vector<8x256xf32>
    %80 = arith.mulf %77, %79 : vector<8x256xf32>
    %81 = vector.extract_strided_slice %2 {offsets = [0, 6], sizes = [8, 1], strides = [1, 1]} : vector<8x9xf32> to vector<8x1xf32>
    %82 = vector.broadcast %81 : vector<8x1xf32> to vector<8x256xf32>
    %83 = arith.mulf %80, %82 : vector<8x256xf32>
    %84 = arith.addf %76, %83 : vector<8x256xf32>
    %c240_i32 = arith.constant 240 : i32
    %85 = tpu.dynamic_rotate %33 by %c240_i32 dim 1 : vector<8x256xf32>, i32 -> vector<8x256xf32>
    %86 = vector.extract_strided_slice %6 {offsets = [7, 0], sizes = [1, 256], strides = [1, 1]} : vector<9x256xf32> to vector<1x256xf32>
    %87 = vector.broadcast %86 : vector<1x256xf32> to vector<8x256xf32>
    %88 = arith.mulf %85, %87 : vector<8x256xf32>
    %89 = vector.extract_strided_slice %2 {offsets = [0, 7], sizes = [8, 1], strides = [1, 1]} : vector<8x9xf32> to vector<8x1xf32>
    %90 = vector.broadcast %89 : vector<8x1xf32> to vector<8x256xf32>
    %91 = arith.mulf %88, %90 : vector<8x256xf32>
    %92 = arith.addf %84, %91 : vector<8x256xf32>
    %c239_i32 = arith.constant 239 : i32
    %93 = tpu.dynamic_rotate %33 by %c239_i32 dim 1 : vector<8x256xf32>, i32 -> vector<8x256xf32>
    %94 = vector.extract_strided_slice %6 {offsets = [8, 0], sizes = [1, 256], strides = [1, 1]} : vector<9x256xf32> to vector<1x256xf32>
    %95 = vector.broadcast %94 : vector<1x256xf32> to vector<8x256xf32>
    %96 = arith.mulf %93, %95 : vector<8x256xf32>
    %97 = vector.extract_strided_slice %2 {offsets = [0, 8], sizes = [8, 1], strides = [1, 1]} : vector<8x9xf32> to vector<8x1xf32>
    %98 = vector.broadcast %97 : vector<8x1xf32> to vector<8x256xf32>
    %99 = arith.mulf %96, %98 : vector<8x256xf32>
    %100 = arith.addf %92, %99 : vector<8x256xf32>
    %101 = vector.broadcast %3 : vector<8x1xf32> to vector<8x256xf32>
    %102 = arith.addf %100, %101 : vector<8x256xf32>
    %cst = arith.constant 0.000000e+00 : f32
    %103 = vector.broadcast %cst : f32 to vector<8x256xf32>
    %104 = arith.maximumf %102, %103 : vector<8x256xf32>
    %105 = vector.extract_strided_slice %4 {offsets = [0, 0], sizes = [4, 1], strides = [1, 1]} : vector<4x8xf32> to vector<4x1xf32>
    %106 = vector.extract_strided_slice %104 {offsets = [0, 0], sizes = [1, 256], strides = [1, 1]} : vector<8x256xf32> to vector<1x256xf32>
    %107 = vector.broadcast %105 : vector<4x1xf32> to vector<4x256xf32>
    %108 = vector.broadcast %106 : vector<1x256xf32> to vector<4x256xf32>
    %109 = arith.mulf %107, %108 : vector<4x256xf32>
    %110 = vector.extract_strided_slice %4 {offsets = [0, 1], sizes = [4, 1], strides = [1, 1]} : vector<4x8xf32> to vector<4x1xf32>
    %111 = vector.extract_strided_slice %104 {offsets = [1, 0], sizes = [1, 256], strides = [1, 1]} : vector<8x256xf32> to vector<1x256xf32>
    %112 = vector.broadcast %110 : vector<4x1xf32> to vector<4x256xf32>
    %113 = vector.broadcast %111 : vector<1x256xf32> to vector<4x256xf32>
    %114 = arith.mulf %112, %113 : vector<4x256xf32>
    %115 = arith.addf %109, %114 : vector<4x256xf32>
    %116 = vector.extract_strided_slice %4 {offsets = [0, 2], sizes = [4, 1], strides = [1, 1]} : vector<4x8xf32> to vector<4x1xf32>
    %117 = vector.extract_strided_slice %104 {offsets = [2, 0], sizes = [1, 256], strides = [1, 1]} : vector<8x256xf32> to vector<1x256xf32>
    %118 = vector.broadcast %116 : vector<4x1xf32> to vector<4x256xf32>
    %119 = vector.broadcast %117 : vector<1x256xf32> to vector<4x256xf32>
    %120 = arith.mulf %118, %119 : vector<4x256xf32>
    %121 = arith.addf %115, %120 : vector<4x256xf32>
    %122 = vector.extract_strided_slice %4 {offsets = [0, 3], sizes = [4, 1], strides = [1, 1]} : vector<4x8xf32> to vector<4x1xf32>
    %123 = vector.extract_strided_slice %104 {offsets = [3, 0], sizes = [1, 256], strides = [1, 1]} : vector<8x256xf32> to vector<1x256xf32>
    %124 = vector.broadcast %122 : vector<4x1xf32> to vector<4x256xf32>
    %125 = vector.broadcast %123 : vector<1x256xf32> to vector<4x256xf32>
    %126 = arith.mulf %124, %125 : vector<4x256xf32>
    %127 = arith.addf %121, %126 : vector<4x256xf32>
    %128 = vector.extract_strided_slice %4 {offsets = [0, 4], sizes = [4, 1], strides = [1, 1]} : vector<4x8xf32> to vector<4x1xf32>
    %129 = vector.extract_strided_slice %104 {offsets = [4, 0], sizes = [1, 256], strides = [1, 1]} : vector<8x256xf32> to vector<1x256xf32>
    %130 = vector.broadcast %128 : vector<4x1xf32> to vector<4x256xf32>
    %131 = vector.broadcast %129 : vector<1x256xf32> to vector<4x256xf32>
    %132 = arith.mulf %130, %131 : vector<4x256xf32>
    %133 = arith.addf %127, %132 : vector<4x256xf32>
    %134 = vector.extract_strided_slice %4 {offsets = [0, 5], sizes = [4, 1], strides = [1, 1]} : vector<4x8xf32> to vector<4x1xf32>
    %135 = vector.extract_strided_slice %104 {offsets = [5, 0], sizes = [1, 256], strides = [1, 1]} : vector<8x256xf32> to vector<1x256xf32>
    %136 = vector.broadcast %134 : vector<4x1xf32> to vector<4x256xf32>
    %137 = vector.broadcast %135 : vector<1x256xf32> to vector<4x256xf32>
    %138 = arith.mulf %136, %137 : vector<4x256xf32>
    %139 = arith.addf %133, %138 : vector<4x256xf32>
    %140 = vector.extract_strided_slice %4 {offsets = [0, 6], sizes = [4, 1], strides = [1, 1]} : vector<4x8xf32> to vector<4x1xf32>
    %141 = vector.extract_strided_slice %104 {offsets = [6, 0], sizes = [1, 256], strides = [1, 1]} : vector<8x256xf32> to vector<1x256xf32>
    %142 = vector.broadcast %140 : vector<4x1xf32> to vector<4x256xf32>
    %143 = vector.broadcast %141 : vector<1x256xf32> to vector<4x256xf32>
    %144 = arith.mulf %142, %143 : vector<4x256xf32>
    %145 = arith.addf %139, %144 : vector<4x256xf32>
    %146 = vector.extract_strided_slice %4 {offsets = [0, 7], sizes = [4, 1], strides = [1, 1]} : vector<4x8xf32> to vector<4x1xf32>
    %147 = vector.extract_strided_slice %104 {offsets = [7, 0], sizes = [1, 256], strides = [1, 1]} : vector<8x256xf32> to vector<1x256xf32>
    %148 = vector.broadcast %146 : vector<4x1xf32> to vector<4x256xf32>
    %149 = vector.broadcast %147 : vector<1x256xf32> to vector<4x256xf32>
    %150 = arith.mulf %148, %149 : vector<4x256xf32>
    %151 = arith.addf %145, %150 : vector<4x256xf32>
    %152 = vector.broadcast %5 : vector<4x1xf32> to vector<4x256xf32>
    %153 = arith.addf %151, %152 : vector<4x256xf32>
    %c0_16 = arith.constant 0 : index
    %c0_17 = arith.constant 0 : index
    %c0_18 = arith.constant 0 : index
    %154 = vector.load %arg9[%c0_16, %c0_17, %c0_18] : memref<2x4x256xf32, #tpu.memory_space<vmem>>, vector<1x4x256xf32>
    %155 = vector.shape_cast %154 : vector<1x4x256xf32> to vector<4x256xf32>
    %156 = vector.shape_cast %153 : vector<4x256xf32> to vector<1x4x256xf32>
    tpu.vector_store %arg9[%c0_16, %c0_17, %c0_18], %156 {strides = array<i32>} : memref<2x4x256xf32, #tpu.memory_space<vmem>>, vector<1x4x256xf32>,
    %c1 = arith.constant 1 : index
    %c0_19 = arith.constant 0 : index
    %c0_20 = arith.constant 0 : index
    %157 = vector.load %arg1[%c1, %c0_19, %c0_20] : memref<2x4x256xf32, #tpu.memory_space<vmem>>, vector<1x4x256xf32>
    %158 = vector.shape_cast %157 : vector<1x4x256xf32> to vector<4x256xf32>
    %159 = vector.extract_strided_slice %0 {offsets = [0, 0], sizes = [8, 1], strides = [1, 1]} : vector<8x4xf32> to vector<8x1xf32>
    %160 = vector.extract_strided_slice %158 {offsets = [0, 0], sizes = [1, 256], strides = [1, 1]} : vector<4x256xf32> to vector<1x256xf32>
    %161 = vector.broadcast %159 : vector<8x1xf32> to vector<8x256xf32>
    %162 = vector.broadcast %160 : vector<1x256xf32> to vector<8x256xf32>
    %163 = arith.mulf %161, %162 : vector<8x256xf32>
    %164 = vector.extract_strided_slice %0 {offsets = [0, 1], sizes = [8, 1], strides = [1, 1]} : vector<8x4xf32> to vector<8x1xf32>
    %165 = vector.extract_strided_slice %158 {offsets = [1, 0], sizes = [1, 256], strides = [1, 1]} : vector<4x256xf32> to vector<1x256xf32>
    %166 = vector.broadcast %164 : vector<8x1xf32> to vector<8x256xf32>
    %167 = vector.broadcast %165 : vector<1x256xf32> to vector<8x256xf32>
    %168 = arith.mulf %166, %167 : vector<8x256xf32>
    %169 = arith.addf %163, %168 : vector<8x256xf32>
    %170 = vector.extract_strided_slice %0 {offsets = [0, 2], sizes = [8, 1], strides = [1, 1]} : vector<8x4xf32> to vector<8x1xf32>
    %171 = vector.extract_strided_slice %158 {offsets = [2, 0], sizes = [1, 256], strides = [1, 1]} : vector<4x256xf32> to vector<1x256xf32>
    %172 = vector.broadcast %170 : vector<8x1xf32> to vector<8x256xf32>
    %173 = vector.broadcast %171 : vector<1x256xf32> to vector<8x256xf32>
    %174 = arith.mulf %172, %173 : vector<8x256xf32>
    %175 = arith.addf %169, %174 : vector<8x256xf32>
    %176 = vector.extract_strided_slice %0 {offsets = [0, 3], sizes = [8, 1], strides = [1, 1]} : vector<8x4xf32> to vector<8x1xf32>
    %177 = vector.extract_strided_slice %158 {offsets = [3, 0], sizes = [1, 256], strides = [1, 1]} : vector<4x256xf32> to vector<1x256xf32>
    %178 = vector.broadcast %176 : vector<8x1xf32> to vector<8x256xf32>
    %179 = vector.broadcast %177 : vector<1x256xf32> to vector<8x256xf32>
    %180 = arith.mulf %178, %179 : vector<8x256xf32>
    %181 = arith.addf %175, %180 : vector<8x256xf32>
    %182 = vector.broadcast %1 : vector<8x1xf32> to vector<8x256xf32>
    %183 = arith.addf %181, %182 : vector<8x256xf32>
    %184 = vector.extract_strided_slice %2 {offsets = [0, 4], sizes = [8, 1], strides = [1, 1]} : vector<8x9xf32> to vector<8x1xf32>
    %185 = vector.broadcast %184 : vector<8x1xf32> to vector<8x256xf32>
    %186 = arith.mulf %183, %185 : vector<8x256xf32>
    %c17_i32_21 = arith.constant 17 : i32
    %187 = tpu.dynamic_rotate %183 by %c17_i32_21 dim 1 : vector<8x256xf32>, i32 -> vector<8x256xf32>
    %188 = vector.extract_strided_slice %6 {offsets = [0, 0], sizes = [1, 256], strides = [1, 1]} : vector<9x256xf32> to vector<1x256xf32>
    %189 = vector.broadcast %188 : vector<1x256xf32> to vector<8x256xf32>
    %190 = arith.mulf %187, %189 : vector<8x256xf32>
    %191 = vector.extract_strided_slice %2 {offsets = [0, 0], sizes = [8, 1], strides = [1, 1]} : vector<8x9xf32> to vector<8x1xf32>
    %192 = vector.broadcast %191 : vector<8x1xf32> to vector<8x256xf32>
    %193 = arith.mulf %190, %192 : vector<8x256xf32>
    %194 = arith.addf %186, %193 : vector<8x256xf32>
    %c16_i32_22 = arith.constant 16 : i32
    %195 = tpu.dynamic_rotate %183 by %c16_i32_22 dim 1 : vector<8x256xf32>, i32 -> vector<8x256xf32>
    %196 = vector.extract_strided_slice %6 {offsets = [1, 0], sizes = [1, 256], strides = [1, 1]} : vector<9x256xf32> to vector<1x256xf32>
    %197 = vector.broadcast %196 : vector<1x256xf32> to vector<8x256xf32>
    %198 = arith.mulf %195, %197 : vector<8x256xf32>
    %199 = vector.extract_strided_slice %2 {offsets = [0, 1], sizes = [8, 1], strides = [1, 1]} : vector<8x9xf32> to vector<8x1xf32>
    %200 = vector.broadcast %199 : vector<8x1xf32> to vector<8x256xf32>
    %201 = arith.mulf %198, %200 : vector<8x256xf32>
    %202 = arith.addf %194, %201 : vector<8x256xf32>
    %c15_i32_23 = arith.constant 15 : i32
    %203 = tpu.dynamic_rotate %183 by %c15_i32_23 dim 1 : vector<8x256xf32>, i32 -> vector<8x256xf32>
    %204 = vector.extract_strided_slice %6 {offsets = [2, 0], sizes = [1, 256], strides = [1, 1]} : vector<9x256xf32> to vector<1x256xf32>
    %205 = vector.broadcast %204 : vector<1x256xf32> to vector<8x256xf32>
    %206 = arith.mulf %203, %205 : vector<8x256xf32>
    %207 = vector.extract_strided_slice %2 {offsets = [0, 2], sizes = [8, 1], strides = [1, 1]} : vector<8x9xf32> to vector<8x1xf32>
    %208 = vector.broadcast %207 : vector<8x1xf32> to vector<8x256xf32>
    %209 = arith.mulf %206, %208 : vector<8x256xf32>
    %210 = arith.addf %202, %209 : vector<8x256xf32>
    %c1_i32_24 = arith.constant 1 : i32
    %211 = tpu.dynamic_rotate %183 by %c1_i32_24 dim 1 : vector<8x256xf32>, i32 -> vector<8x256xf32>
    %212 = vector.extract_strided_slice %6 {offsets = [3, 0], sizes = [1, 256], strides = [1, 1]} : vector<9x256xf32> to vector<1x256xf32>
    %213 = vector.broadcast %212 : vector<1x256xf32> to vector<8x256xf32>
    %214 = arith.mulf %211, %213 : vector<8x256xf32>
    %215 = vector.extract_strided_slice %2 {offsets = [0, 3], sizes = [8, 1], strides = [1, 1]} : vector<8x9xf32> to vector<8x1xf32>
    %216 = vector.broadcast %215 : vector<8x1xf32> to vector<8x256xf32>
    %217 = arith.mulf %214, %216 : vector<8x256xf32>
    %218 = arith.addf %210, %217 : vector<8x256xf32>
    %c255_i32_25 = arith.constant 255 : i32
    %219 = tpu.dynamic_rotate %183 by %c255_i32_25 dim 1 : vector<8x256xf32>, i32 -> vector<8x256xf32>
    %220 = vector.extract_strided_slice %6 {offsets = [5, 0], sizes = [1, 256], strides = [1, 1]} : vector<9x256xf32> to vector<1x256xf32>
    %221 = vector.broadcast %220 : vector<1x256xf32> to vector<8x256xf32>
    %222 = arith.mulf %219, %221 : vector<8x256xf32>
    %223 = vector.extract_strided_slice %2 {offsets = [0, 5], sizes = [8, 1], strides = [1, 1]} : vector<8x9xf32> to vector<8x1xf32>
    %224 = vector.broadcast %223 : vector<8x1xf32> to vector<8x256xf32>
    %225 = arith.mulf %222, %224 : vector<8x256xf32>
    %226 = arith.addf %218, %225 : vector<8x256xf32>
    %c241_i32_26 = arith.constant 241 : i32
    %227 = tpu.dynamic_rotate %183 by %c241_i32_26 dim 1 : vector<8x256xf32>, i32 -> vector<8x256xf32>
    %228 = vector.extract_strided_slice %6 {offsets = [6, 0], sizes = [1, 256], strides = [1, 1]} : vector<9x256xf32> to vector<1x256xf32>
    %229 = vector.broadcast %228 : vector<1x256xf32> to vector<8x256xf32>
    %230 = arith.mulf %227, %229 : vector<8x256xf32>
    %231 = vector.extract_strided_slice %2 {offsets = [0, 6], sizes = [8, 1], strides = [1, 1]} : vector<8x9xf32> to vector<8x1xf32>
    %232 = vector.broadcast %231 : vector<8x1xf32> to vector<8x256xf32>
    %233 = arith.mulf %230, %232 : vector<8x256xf32>
    %234 = arith.addf %226, %233 : vector<8x256xf32>
    %c240_i32_27 = arith.constant 240 : i32
    %235 = tpu.dynamic_rotate %183 by %c240_i32_27 dim 1 : vector<8x256xf32>, i32 -> vector<8x256xf32>
    %236 = vector.extract_strided_slice %6 {offsets = [7, 0], sizes = [1, 256], strides = [1, 1]} : vector<9x256xf32> to vector<1x256xf32>
    %237 = vector.broadcast %236 : vector<1x256xf32> to vector<8x256xf32>
    %238 = arith.mulf %235, %237 : vector<8x256xf32>
    %239 = vector.extract_strided_slice %2 {offsets = [0, 7], sizes = [8, 1], strides = [1, 1]} : vector<8x9xf32> to vector<8x1xf32>
    %240 = vector.broadcast %239 : vector<8x1xf32> to vector<8x256xf32>
    %241 = arith.mulf %238, %240 : vector<8x256xf32>
    %242 = arith.addf %234, %241 : vector<8x256xf32>
    %c239_i32_28 = arith.constant 239 : i32
    %243 = tpu.dynamic_rotate %183 by %c239_i32_28 dim 1 : vector<8x256xf32>, i32 -> vector<8x256xf32>
    %244 = vector.extract_strided_slice %6 {offsets = [8, 0], sizes = [1, 256], strides = [1, 1]} : vector<9x256xf32> to vector<1x256xf32>
    %245 = vector.broadcast %244 : vector<1x256xf32> to vector<8x256xf32>
    %246 = arith.mulf %243, %245 : vector<8x256xf32>
    %247 = vector.extract_strided_slice %2 {offsets = [0, 8], sizes = [8, 1], strides = [1, 1]} : vector<8x9xf32> to vector<8x1xf32>
    %248 = vector.broadcast %247 : vector<8x1xf32> to vector<8x256xf32>
    %249 = arith.mulf %246, %248 : vector<8x256xf32>
    %250 = arith.addf %242, %249 : vector<8x256xf32>
    %251 = vector.broadcast %3 : vector<8x1xf32> to vector<8x256xf32>
    %252 = arith.addf %250, %251 : vector<8x256xf32>
    %cst_29 = arith.constant 0.000000e+00 : f32
    %253 = vector.broadcast %cst_29 : f32 to vector<8x256xf32>
    %254 = arith.maximumf %252, %253 : vector<8x256xf32>
    %255 = vector.extract_strided_slice %4 {offsets = [0, 0], sizes = [4, 1], strides = [1, 1]} : vector<4x8xf32> to vector<4x1xf32>
    %256 = vector.extract_strided_slice %254 {offsets = [0, 0], sizes = [1, 256], strides = [1, 1]} : vector<8x256xf32> to vector<1x256xf32>
    %257 = vector.broadcast %255 : vector<4x1xf32> to vector<4x256xf32>
    %258 = vector.broadcast %256 : vector<1x256xf32> to vector<4x256xf32>
    %259 = arith.mulf %257, %258 : vector<4x256xf32>
    %260 = vector.extract_strided_slice %4 {offsets = [0, 1], sizes = [4, 1], strides = [1, 1]} : vector<4x8xf32> to vector<4x1xf32>
    %261 = vector.extract_strided_slice %254 {offsets = [1, 0], sizes = [1, 256], strides = [1, 1]} : vector<8x256xf32> to vector<1x256xf32>
    %262 = vector.broadcast %260 : vector<4x1xf32> to vector<4x256xf32>
    %263 = vector.broadcast %261 : vector<1x256xf32> to vector<4x256xf32>
    %264 = arith.mulf %262, %263 : vector<4x256xf32>
    %265 = arith.addf %259, %264 : vector<4x256xf32>
    %266 = vector.extract_strided_slice %4 {offsets = [0, 2], sizes = [4, 1], strides = [1, 1]} : vector<4x8xf32> to vector<4x1xf32>
    %267 = vector.extract_strided_slice %254 {offsets = [2, 0], sizes = [1, 256], strides = [1, 1]} : vector<8x256xf32> to vector<1x256xf32>
    %268 = vector.broadcast %266 : vector<4x1xf32> to vector<4x256xf32>
    %269 = vector.broadcast %267 : vector<1x256xf32> to vector<4x256xf32>
    %270 = arith.mulf %268, %269 : vector<4x256xf32>
    %271 = arith.addf %265, %270 : vector<4x256xf32>
    %272 = vector.extract_strided_slice %4 {offsets = [0, 3], sizes = [4, 1], strides = [1, 1]} : vector<4x8xf32> to vector<4x1xf32>
    %273 = vector.extract_strided_slice %254 {offsets = [3, 0], sizes = [1, 256], strides = [1, 1]} : vector<8x256xf32> to vector<1x256xf32>
    %274 = vector.broadcast %272 : vector<4x1xf32> to vector<4x256xf32>
    %275 = vector.broadcast %273 : vector<1x256xf32> to vector<4x256xf32>
    %276 = arith.mulf %274, %275 : vector<4x256xf32>
    %277 = arith.addf %271, %276 : vector<4x256xf32>
    %278 = vector.extract_strided_slice %4 {offsets = [0, 4], sizes = [4, 1], strides = [1, 1]} : vector<4x8xf32> to vector<4x1xf32>
    %279 = vector.extract_strided_slice %254 {offsets = [4, 0], sizes = [1, 256], strides = [1, 1]} : vector<8x256xf32> to vector<1x256xf32>
    %280 = vector.broadcast %278 : vector<4x1xf32> to vector<4x256xf32>
    %281 = vector.broadcast %279 : vector<1x256xf32> to vector<4x256xf32>
    %282 = arith.mulf %280, %281 : vector<4x256xf32>
    %283 = arith.addf %277, %282 : vector<4x256xf32>
    %284 = vector.extract_strided_slice %4 {offsets = [0, 5], sizes = [4, 1], strides = [1, 1]} : vector<4x8xf32> to vector<4x1xf32>
    %285 = vector.extract_strided_slice %254 {offsets = [5, 0], sizes = [1, 256], strides = [1, 1]} : vector<8x256xf32> to vector<1x256xf32>
    %286 = vector.broadcast %284 : vector<4x1xf32> to vector<4x256xf32>
    %287 = vector.broadcast %285 : vector<1x256xf32> to vector<4x256xf32>
    %288 = arith.mulf %286, %287 : vector<4x256xf32>
    %289 = arith.addf %283, %288 : vector<4x256xf32>
    %290 = vector.extract_strided_slice %4 {offsets = [0, 6], sizes = [4, 1], strides = [1, 1]} : vector<4x8xf32> to vector<4x1xf32>
    %291 = vector.extract_strided_slice %254 {offsets = [6, 0], sizes = [1, 256], strides = [1, 1]} : vector<8x256xf32> to vector<1x256xf32>
    %292 = vector.broadcast %290 : vector<4x1xf32> to vector<4x256xf32>
    %293 = vector.broadcast %291 : vector<1x256xf32> to vector<4x256xf32>
    %294 = arith.mulf %292, %293 : vector<4x256xf32>
    %295 = arith.addf %289, %294 : vector<4x256xf32>
    %296 = vector.extract_strided_slice %4 {offsets = [0, 7], sizes = [4, 1], strides = [1, 1]} : vector<4x8xf32> to vector<4x1xf32>
    %297 = vector.extract_strided_slice %254 {offsets = [7, 0], sizes = [1, 256], strides = [1, 1]} : vector<8x256xf32> to vector<1x256xf32>
    %298 = vector.broadcast %296 : vector<4x1xf32> to vector<4x256xf32>
    %299 = vector.broadcast %297 : vector<1x256xf32> to vector<4x256xf32>
    %300 = arith.mulf %298, %299 : vector<4x256xf32>
    %301 = arith.addf %295, %300 : vector<4x256xf32>
    %302 = vector.broadcast %5 : vector<4x1xf32> to vector<4x256xf32>
    %303 = arith.addf %301, %302 : vector<4x256xf32>
    %c1_30 = arith.constant 1 : index
    %c0_31 = arith.constant 0 : index
    %c0_32 = arith.constant 0 : index
    %304 = vector.load %arg9[%c1_30, %c0_31, %c0_32] : memref<2x4x256xf32, #tpu.memory_space<vmem>>, vector<1x4x256xf32>
    %305 = vector.shape_cast %304 : vector<1x4x256xf32> to vector<4x256xf32>
    %306 = vector.shape_cast %303 : vector<4x256xf32> to vector<1x4x256xf32>
    tpu.vector_store %arg9[%c1_30, %c0_31, %c0_32], %306 {strides = array<i32>} : memref<2x4x256xf32, #tpu.memory_space<vmem>>, vector<1x4x256xf32>,
    return
  }
  func.func @transform_0(%arg0: i32) -> (i32, i32, i32) {
    %c0_i32 = arith.constant 0 : i32
    %c0_i32_0 = arith.constant 0 : i32
    %c0_i32_1 = arith.constant 0 : i32
    return %arg0, %c0_i32, %c0_i32_0 : i32, i32, i32
  }
  func.func @transform_1(%arg0: i32) -> (i32, i32) {
    %c0_i32 = arith.constant 0 : i32
    %c0_i32_0 = arith.constant 0 : i32
    %c0_i32_1 = arith.constant 0 : i32
    return %c0_i32, %c0_i32_0 : i32, i32
  }
  func.func @transform_2(%arg0: i32) -> (i32, i32) {
    %c0_i32 = arith.constant 0 : i32
    %c0_i32_0 = arith.constant 0 : i32
    %c0_i32_1 = arith.constant 0 : i32
    return %c0_i32, %c0_i32_0 : i32, i32
  }
  func.func @transform_3(%arg0: i32) -> (i32, i32) {
    %c0_i32 = arith.constant 0 : i32
    %c0_i32_0 = arith.constant 0 : i32
    %c0_i32_1 = arith.constant 0 : i32
    return %c0_i32, %c0_i32_0 : i32, i32
  }
  func.func @transform_4(%arg0: i32) -> (i32, i32) {
    %c0_i32 = arith.constant 0 : i32
    %c0_i32_0 = arith.constant 0 : i32
    %c0_i32_1 = arith.constant 0 : i32
    return %c0_i32, %c0_i32_0 : i32, i32
  }
  func.func @transform_5(%arg0: i32) -> (i32, i32) {
    %c0_i32 = arith.constant 0 : i32
    %c0_i32_0 = arith.constant 0 : i32
    %c0_i32_1 = arith.constant 0 : i32
    return %c0_i32, %c0_i32_0 : i32, i32
  }
  func.func @transform_6(%arg0: i32) -> (i32, i32) {
    %c0_i32 = arith.constant 0 : i32
    %c0_i32_0 = arith.constant 0 : i32
    %c0_i32_1 = arith.constant 0 : i32
    return %c0_i32, %c0_i32_0 : i32, i32
  }
  func.func @transform_7(%arg0: i32) -> (i32, i32) {
    %c0_i32 = arith.constant 0 : i32
    %c0_i32_0 = arith.constant 0 : i32
    %c0_i32_1 = arith.constant 0 : i32
    return %c0_i32, %c0_i32_0 : i32, i32
  }
  func.func @transform_8(%arg0: i32) -> (i32, i32, i32) {
    %c0_i32 = arith.constant 0 : i32
    %c0_i32_0 = arith.constant 0 : i32
    %c0_i32_1 = arith.constant 0 : i32
    return %arg0, %c0_i32, %c0_i32_0 : i32, i32, i32
  }
}

</mosaic_0001>

<llo_original>
// kernel: tpu_custom_call.1
$region0: #{tpu_custom_call.1}
  #allocation0 [shape = 'u32[]', space=smem, size = 0x4, offset = 0x4, fixed_abs, tag = 'smem constant byte address 0x4 - core index']
  #allocation1 [shape = 'u32[72,128]{1,0:T(1,128)}', space=vmem, size = 0x9000, scoped, tag = 'internal scratch']
  %s0 = inlined_call_operand.vmem [shape: f32[2,4,256], index: 0, kind: input, shape index: {}]
  %s1 = inlined_call_operand.hbm [shape: f32[9,256], index: 1, kind: input, shape index: {}]
  %s2 = inlined_call_operand.vmem [shape: f32[8,4], index: 2, kind: input, shape index: {}]
  %s3 = inlined_call_operand.vmem [shape: f32[8,1], index: 3, kind: input, shape index: {}]
  %s4 = inlined_call_operand.vmem [shape: f32[8,9], index: 4, kind: input, shape index: {}]
  %s5 = inlined_call_operand.vmem [shape: f32[8,1], index: 5, kind: input, shape index: {}]
  %s6 = inlined_call_operand.vmem [shape: f32[4,8], index: 6, kind: input, shape index: {}]
  %s7 = inlined_call_operand.vmem [shape: f32[4,1], index: 7, kind: input, shape index: {}]
  %s8 = inlined_call_operand.hbm [shape: f32[2,4,256], index: 8, kind: output, shape index: {}]
  %s9 = sld [smem:[#allocation0]]
  $region46: #{tpu_custom_call.1} parent=0
    _
  %s11 = ssub.s32 1, %s9
  %s12 = scalar_select 0, %s11, %s9
  $region1: #{tpu_custom_call.1} parent=0
    #allocation2 [shape = 'u8[16384]{0}', space=vmem, size = 0x4000, scoped, tag = 'input window, operand 1, single buffered']
    #allocation3 [shape = 's32[1]{0}', space=sflag, size = 0x4, scoped, tag = 'scoped memory for tpu_custom_call.1']
    #allocation4 [shape = 's32[1]{0}', space=sflag, size = 0x4, scoped, tag = 'scoped memory for tpu_custom_call.1']
    #allocation5 [shape = 'u8[8192]{0}', space=vmem, size = 0x2000, scoped, tag = 'output window, operand 0, single buffered']
    %13 = vsyncpa [#allocation3], 0
    %14 = vsyncpa [#allocation4], 0
    // Predicated region
    $region2: #{tpu_custom_call.1} parent=1 // pred_check
      _
    $region3: #{tpu_custom_call.1} parent=1 // pred_check_branch
      %16 = sbr.rel (0) target = $region5
    $region4: #{tpu_custom_call.1} parent=1 // pred_region
      _
    $region5: #{tpu_custom_call.1} parent=1 // pred_fallthru
      _
    // Predicated region
    $region6: #{tpu_custom_call.1} parent=1 // pred_check
      _
    $region7: #{tpu_custom_call.1} parent=1 // pred_check_branch
      %18 = sbr.rel (0) target = $region9
    $region8: #{tpu_custom_call.1} parent=1 // pred_region
      %20 = vsyncadd [#allocation3], 0
      %s21 = sshll.u32 %s1, 4
      %s22 = int_to_ptr.hbm [resolvable:$true] %s21
      %s23 = sshll.u32 [#allocation2], 4
      %s24 = int_to_ptr.vmem [resolvable:$true] %s23
      %29 = dma.hbm_to_vmem [thread:$0]  %s22, 512, %s24, [#allocation3], 256, 256, 16
    $region9: #{tpu_custom_call.1} parent=1 // pred_fallthru
      _
    // Predicated region
    $region10: #{tpu_custom_call.1} parent=1 // pred_check
      _
    $region11: #{tpu_custom_call.1} parent=1 // pred_check_branch
      %31 = sbr.rel (0) target = $region13
    $region12: #{tpu_custom_call.1} parent=1 // pred_region
      _
    $region13: #{tpu_custom_call.1} parent=1 // pred_fallthru
      _
    // Predicated region
    $region14: #{tpu_custom_call.1} parent=1 // pred_check
      _
    $region15: #{tpu_custom_call.1} parent=1 // pred_check_branch
      %33 = sbr.rel (0) target = $region17
    $region16: #{tpu_custom_call.1} parent=1 // pred_region
      _
    $region17: #{tpu_custom_call.1} parent=1 // pred_fallthru
      _
    // Predicated region
    $region18: #{tpu_custom_call.1} parent=1 // pred_check
      _
    $region19: #{tpu_custom_call.1} parent=1 // pred_check_branch
      %35 = sbr.rel (0) target = $region21
    $region20: #{tpu_custom_call.1} parent=1 // pred_region
      _
    $region21: #{tpu_custom_call.1} parent=1 // pred_fallthru
      _
    // Predicated region
    $region22: #{tpu_custom_call.1} parent=1 // pred_check
      _
    $region23: #{tpu_custom_call.1} parent=1 // pred_check_branch
      %37 = sbr.rel (0) target = $region25
    $region24: #{tpu_custom_call.1} parent=1 // pred_region
      _
    $region25: #{tpu_custom_call.1} parent=1 // pred_fallthru
      _
    // Predicated region
    $region26: #{tpu_custom_call.1} parent=1 // pred_check
      _
    $region27: #{tpu_custom_call.1} parent=1 // pred_check_branch
      %39 = sbr.rel (0) target = $region29
    $region28: #{tpu_custom_call.1} parent=1 // pred_region
      _
    $region29: #{tpu_custom_call.1} parent=1 // pred_fallthru
      _
    // Predicated region
    $region30: #{tpu_custom_call.1} parent=1 // pred_check
      _
    $region31: #{tpu_custom_call.1} parent=1 // pred_check_branch
      %41 = sbr.rel (0) target = $region33
    $region32: #{tpu_custom_call.1} parent=1 // pred_region
      _
    $region33: #{tpu_custom_call.1} parent=1 // pred_fallthru
      _
    // Predicated region
    $region34: #{tpu_custom_call.1} parent=1 // pred_check
      _
    $region35: #{tpu_custom_call.1} parent=1 // pred_check_branch
      %43 = sbr.rel (0) target = $region37
    $region36: #{tpu_custom_call.1} parent=1 // pred_region
      %45 = dma.done [#allocation3], 512
    $region37: #{tpu_custom_call.1} parent=1 // pred_fallthru
      _
    %v46 = vld [vmem:[%s2] sm:$0xff]
    %v47 = vld [vmem:[%s3] sm:$0xff]
    %v48 = vld [vmem:[%s4] sm:$0xff]
    %v49 = vld [vmem:[%s5] sm:$0xff]
    %v50 = vld [vmem:[%s6] sm:$0xf]
    %v51 = vld [vmem:[%s7] sm:$0xf]
    %v52 = vld [vmem:[#allocation2] sm:$0xff]
    %v53 = vld [vmem:[#allocation2 + $0x8] sm:$0xff]
    %v54 = vld [vmem:[#allocation2 + $0x10] sm:$0x1]
    %v55 = vld [vmem:[#allocation2 + $0x18] sm:$0x1]
    %v56 = vld [vmem:[%s0] sm:$0xff]
    %58 = vset.pattern.permute.xlu0 0
    %59 = vperm.xlu0 %58, %v46
    %v60 = vpop.permute.xlu0 %59
    %v63 = vperm.slane %v56, 0
    %v64 = vperm.slane %v56, 4
    %v67 = vperm.slane %v63, 0
    %v68 = vperm.slane %v64, 0
    %v69 = vmul.f32 %v60, %v67
    %v70 = vmul.f32 %v60, %v68
    %71 = vset.pattern.permute.xlu0 1
    %72 = vperm.xlu0 %71, %v46
    %v73 = vpop.permute.xlu0 %72
    %v75 = vperm.slane %v56, 1
    %v76 = vperm.slane %v56, 5
    %v79 = vperm.slane %v75, 1
    %v80 = vperm.slane %v76, 1
    %v81 = vmul.f32 %v73, %v79
    %v82 = vmul.f32 %v73, %v80
    %v83 = vadd.f32 %v69, %v81
    %v84 = vadd.f32 %v70, %v82
    %85 = vset.pattern.permute.xlu0 2
    %86 = vperm.xlu0 %85, %v46
    %v87 = vpop.permute.xlu0 %86
    %v89 = vperm.slane %v56, 2
    %v90 = vperm.slane %v56, 6
    %v93 = vperm.slane %v89, 2
    %v94 = vperm.slane %v90, 2
    %v95 = vmul.f32 %v87, %v93
    %v96 = vmul.f32 %v87, %v94
    %v97 = vadd.f32 %v83, %v95
    %v98 = vadd.f32 %v84, %v96
    %99 = vset.pattern.permute.xlu0 3
    %100 = vperm.xlu0 %99, %v46
    %v101 = vpop.permute.xlu0 %100
    %v103 = vperm.slane %v56, 3
    %v104 = vperm.slane %v56, 7
    %v107 = vperm.slane %v103, 3
    %v108 = vperm.slane %v104, 3
    %v109 = vmul.f32 %v101, %v107
    %v110 = vmul.f32 %v101, %v108
    %v111 = vadd.f32 %v97, %v109
    %v112 = vadd.f32 %v98, %v110
    %114 = vset.pattern.permute.xlu0 0
    %115 = vperm.xlu0 %114, %v47
    %v116 = vpop.permute.xlu0 %115
    %v118 = vadd.f32 %v111, %v116
    %v119 = vadd.f32 %v112, %v116
    %121 = vset.pattern.permute.xlu0 4
    %122 = vperm.xlu0 %121, %v48
    %v123 = vpop.permute.xlu0 %122
    %v125 = vmul.f32 %v118, %v123
    %v126 = vmul.f32 %v119, %v123
    %127 = vrot.lane.b32.xlu0 %v118, 17
    %v128 = vpop.permute.xlu0 %127
    %129 = vrot.lane.b32.xlu0 %v119, 17
    %v130 = vpop.permute.xlu0 %129
    %v131 = vlaneseq
    %v132 = vand.u32 %v131, 127
    %vm133 = vcmp.lt.s32.totalorder %v132, 17
    %v134 = vsel %vm133, %v128, %v130
    %v135 = vsel %vm133, %v130, %v128
    %v136 = vperm.slane %v52, 0
    %v137 = vperm.slane %v53, 0
    %v138 = vmul.f32 %v135, %v136
    %v139 = vmul.f32 %v134, %v137
    %140 = vset.pattern.permute.xlu0 0
    %141 = vperm.xlu0 %140, %v48
    %v142 = vpop.permute.xlu0 %141
    %v144 = vmul.f32 %v138, %v142
    %v145 = vmul.f32 %v139, %v142
    %v146 = vadd.f32 %v125, %v144
    %v147 = vadd.f32 %v126, %v145
    %148 = vrot.lane.b32.xlu0 %v118, 16
    %v149 = vpop.permute.xlu0 %148
    %150 = vrot.lane.b32.xlu0 %v119, 16
    %v151 = vpop.permute.xlu0 %150
    %vm152 = vcmp.lt.s32.totalorder %v132, 16
    %v153 = vsel %vm152, %v149, %v151
    %v154 = vsel %vm152, %v151, %v149
    %v155 = vperm.slane %v52, 1
    %v156 = vperm.slane %v53, 1
    %v157 = vmul.f32 %v154, %v155
    %v158 = vmul.f32 %v153, %v156
    %159 = vset.pattern.permute.xlu0 1
    %160 = vperm.xlu0 %159, %v48
    %v161 = vpop.permute.xlu0 %160
    %v163 = vmul.f32 %v157, %v161
    %v164 = vmul.f32 %v158, %v161
    %v165 = vadd.f32 %v146, %v163
    %v166 = vadd.f32 %v147, %v164
    %167 = vrot.lane.b32.xlu0 %v118, 15
    %v168 = vpop.permute.xlu0 %167
    %169 = vrot.lane.b32.xlu0 %v119, 15
    %v170 = vpop.permute.xlu0 %169
    %vm171 = vcmp.lt.s32.totalorder %v132, 15
    %v172 = vsel %vm171, %v168, %v170
    %v173 = vsel %vm171, %v170, %v168
    %v174 = vperm.slane %v52, 2
    %v175 = vperm.slane %v53, 2
    %v176 = vmul.f32 %v173, %v174
    %v177 = vmul.f32 %v172, %v175
    %178 = vset.pattern.permute.xlu0 2
    %179 = vperm.xlu0 %178, %v48
    %v180 = vpop.permute.xlu0 %179
    %v182 = vmul.f32 %v176, %v180
    %v183 = vmul.f32 %v177, %v180
    %v184 = vadd.f32 %v165, %v182
    %v185 = vadd.f32 %v166, %v183
    %186 = vrot.lane.b32.xlu0 %v118, 1
    %v187 = vpop.permute.xlu0 %186
    %188 = vrot.lane.b32.xlu0 %v119, 1
    %v189 = vpop.permute.xlu0 %188
    %vm190 = vcmp.lt.s32.totalorder %v132, 1
    %v191 = vsel %vm190, %v187, %v189
    %v192 = vsel %vm190, %v189, %v187
    %v193 = vperm.slane %v52, 3
    %v194 = vperm.slane %v53, 3
    %v195 = vmul.f32 %v192, %v193
    %v196 = vmul.f32 %v191, %v194
    %197 = vset.pattern.permute.xlu0 3
    %198 = vperm.xlu0 %197, %v48
    %v199 = vpop.permute.xlu0 %198
    %v201 = vmul.f32 %v195, %v199
    %v202 = vmul.f32 %v196, %v199
    %v203 = vadd.f32 %v184, %v201
    %v204 = vadd.f32 %v185, %v202
    %205 = vrot.lane.b32.xlu0 %v118, 127
    %v206 = vpop.permute.xlu0 %205
    %207 = vrot.lane.b32.xlu0 %v119, 127
    %v208 = vpop.permute.xlu0 %207
    %vm209 = vcmp.lt.s32.totalorder %v132, 127
    %v210 = vsel %vm209, %v206, %v208
    %v211 = vsel %vm209, %v208, %v206
    %v212 = vperm.slane %v52, 5
    %v213 = vperm.slane %v53, 5
    %v214 = vmul.f32 %v210, %v212
    %v215 = vmul.f32 %v211, %v213
    %216 = vset.pattern.permute.xlu0 5
    %217 = vperm.xlu0 %216, %v48
    %v218 = vpop.permute.xlu0 %217
    %v220 = vmul.f32 %v214, %v218
    %v221 = vmul.f32 %v215, %v218
    %v222 = vadd.f32 %v203, %v220
    %v223 = vadd.f32 %v204, %v221
    %224 = vrot.lane.b32.xlu0 %v118, 113
    %v225 = vpop.permute.xlu0 %224
    %226 = vrot.lane.b32.xlu0 %v119, 113
    %v227 = vpop.permute.xlu0 %226
    %vm228 = vcmp.lt.s32.totalorder %v132, 113
    %v229 = vsel %vm228, %v225, %v227
    %v230 = vsel %vm228, %v227, %v225
    %v231 = vperm.slane %v52, 6
    %v232 = vperm.slane %v53, 6
    %v233 = vmul.f32 %v229, %v231
    %v234 = vmul.f32 %v230, %v232
    %235 = vset.pattern.permute.xlu0 6
    %236 = vperm.xlu0 %235, %v48
    %v237 = vpop.permute.xlu0 %236
    %v239 = vmul.f32 %v233, %v237
    %v240 = vmul.f32 %v234, %v237
    %v241 = vadd.f32 %v222, %v239
    %v242 = vadd.f32 %v223, %v240
    %243 = vrot.lane.b32.xlu0 %v118, 112
    %v244 = vpop.permute.xlu0 %243
    %245 = vrot.lane.b32.xlu0 %v119, 112
    %v246 = vpop.permute.xlu0 %245
    %vm247 = vcmp.lt.s32.totalorder %v132, 112
    %v248 = vsel %vm247, %v244, %v246
    %v249 = vsel %vm247, %v246, %v244
    %v250 = vperm.slane %v52, 7
    %v251 = vperm.slane %v53, 7
    %v252 = vmul.f32 %v248, %v250
    %v253 = vmul.f32 %v249, %v251
    %254 = vset.pattern.permute.xlu0 7
    %255 = vperm.xlu0 %254, %v48
    %v256 = vpop.permute.xlu0 %255
    %v258 = vmul.f32 %v252, %v256
    %v259 = vmul.f32 %v253, %v256
    %v260 = vadd.f32 %v241, %v258
    %v261 = vadd.f32 %v242, %v259
    %262 = vrot.lane.b32.xlu0 %v118, 111
    %v263 = vpop.permute.xlu0 %262
    %264 = vrot.lane.b32.xlu0 %v119, 111
    %v265 = vpop.permute.xlu0 %264
    %vm266 = vcmp.lt.s32.totalorder %v132, 111
    %v267 = vsel %vm266, %v263, %v265
    %v268 = vsel %vm266, %v265, %v263
    %v269 = vperm.slane %v54, 0
    %v270 = vperm.slane %v55, 0
    %v271 = vmul.f32 %v267, %v269
    %v272 = vmul.f32 %v268, %v270
    %273 = vset.pattern.permute.xlu0 8
    %274 = vperm.xlu0 %273, %v48
    %v275 = vpop.permute.xlu0 %274
    %v277 = vmul.f32 %v271, %v275
    %v278 = vmul.f32 %v272, %v275
    %v279 = vadd.f32 %v260, %v277
    %v280 = vadd.f32 %v261, %v278
    %282 = vset.pattern.permute.xlu0 0
    %283 = vperm.xlu0 %282, %v49
    %v284 = vpop.permute.xlu0 %283
    %v286 = vadd.f32 %v279, %v284
    %v287 = vadd.f32 %v280, %v284
    %v288 = vmax.f32 %v286, 0.0
    %v289 = vmax.f32 %v287, 0.0
    %291 = vset.pattern.permute.xlu0 0
    %292 = vperm.xlu0 %291, %v50
    %v293 = vpop.permute.xlu0 %292
    %v295 = vperm.slane %v288, 0
    %v296 = vperm.slane %v289, 0
    %v297 = vmul.f32 %v293, %v295
    %v298 = vmul.f32 %v293, %v296
    %299 = vset.pattern.permute.xlu0 1
    %300 = vperm.xlu0 %299, %v50
    %v301 = vpop.permute.xlu0 %300
    %v303 = vperm.slane %v288, 1
    %v304 = vperm.slane %v289, 1
    %v305 = vmul.f32 %v301, %v303
    %v306 = vmul.f32 %v301, %v304
    %v307 = vadd.f32 %v297, %v305
    %v308 = vadd.f32 %v298, %v306
    %309 = vset.pattern.permute.xlu0 2
    %310 = vperm.xlu0 %309, %v50
    %v311 = vpop.permute.xlu0 %310
    %v313 = vperm.slane %v288, 2
    %v314 = vperm.slane %v289, 2
    %v315 = vmul.f32 %v311, %v313
    %v316 = vmul.f32 %v311, %v314
    %v317 = vadd.f32 %v307, %v315
    %v318 = vadd.f32 %v308, %v316
    %319 = vset.pattern.permute.xlu0 3
    %320 = vperm.xlu0 %319, %v50
    %v321 = vpop.permute.xlu0 %320
    %v323 = vperm.slane %v288, 3
    %v324 = vperm.slane %v289, 3
    %v325 = vmul.f32 %v321, %v323
    %v326 = vmul.f32 %v321, %v324
    %v327 = vadd.f32 %v317, %v325
    %v328 = vadd.f32 %v318, %v326
    %329 = vset.pattern.permute.xlu0 4
    %330 = vperm.xlu0 %329, %v50
    %v331 = vpop.permute.xlu0 %330
    %v333 = vperm.slane %v288, 4
    %v334 = vperm.slane %v289, 4
    %v335 = vmul.f32 %v331, %v333
    %v336 = vmul.f32 %v331, %v334
    %v337 = vadd.f32 %v327, %v335
    %v338 = vadd.f32 %v328, %v336
    %339 = vset.pattern.permute.xlu0 5
    %340 = vperm.xlu0 %339, %v50
    %v341 = vpop.permute.xlu0 %340
    %v343 = vperm.slane %v288, 5
    %v344 = vperm.slane %v289, 5
    %v345 = vmul.f32 %v341, %v343
    %v346 = vmul.f32 %v341, %v344
    %v347 = vadd.f32 %v337, %v345
    %v348 = vadd.f32 %v338, %v346
    %349 = vset.pattern.permute.xlu0 6
    %350 = vperm.xlu0 %349, %v50
    %v351 = vpop.permute.xlu0 %350
    %v353 = vperm.slane %v288, 6
    %v354 = vperm.slane %v289, 6
    %v355 = vmul.f32 %v351, %v353
    %v356 = vmul.f32 %v351, %v354
    %v357 = vadd.f32 %v347, %v355
    %v358 = vadd.f32 %v348, %v356
    %359 = vset.pattern.permute.xlu0 7
    %360 = vperm.xlu0 %359, %v50
    %v361 = vpop.permute.xlu0 %360
    %v363 = vperm.slane %v288, 7
    %v364 = vperm.slane %v289, 7
    %v365 = vmul.f32 %v361, %v363
    %v366 = vmul.f32 %v361, %v364
    %v367 = vadd.f32 %v357, %v365
    %v368 = vadd.f32 %v358, %v366
    %370 = vset.pattern.permute.xlu0 0
    %371 = vperm.xlu0 %370, %v51
    %v372 = vpop.permute.xlu0 %371
    %v374 = vadd.f32 %v367, %v372
    %v375 = vadd.f32 %v368, %v372
    %v378 = vrot.slane %v375, 4
    %vm379 = vcmask 1043456
    %v380 = vsel %vm379, %v374, %v378
    %382 = vst [vmem:[#allocation5] sm:$0xff] %v380
    %s383 = scalar_lea.vmem %s0, 8
    %v384 = vld [vmem:[%s383] sm:$0xff]
    %v386 = vperm.slane %v384, 0
    %v387 = vperm.slane %v384, 4
    %v390 = vperm.slane %v386, 0
    %v391 = vperm.slane %v387, 0
    %v392 = vmul.f32 %v60, %v390
    %v393 = vmul.f32 %v60, %v391
    %v394 = vperm.slane %v384, 1
    %v395 = vperm.slane %v384, 5
    %v398 = vperm.slane %v394, 1
    %v399 = vperm.slane %v395, 1
    %v400 = vmul.f32 %v73, %v398
    %v401 = vmul.f32 %v73, %v399
    %v402 = vadd.f32 %v392, %v400
    %v403 = vadd.f32 %v393, %v401
    %v404 = vperm.slane %v384, 2
    %v405 = vperm.slane %v384, 6
    %v408 = vperm.slane %v404, 2
    %v409 = vperm.slane %v405, 2
    %v410 = vmul.f32 %v87, %v408
    %v411 = vmul.f32 %v87, %v409
    %v412 = vadd.f32 %v402, %v410
    %v413 = vadd.f32 %v403, %v411
    %v414 = vperm.slane %v384, 3
    %v415 = vperm.slane %v384, 7
    %v418 = vperm.slane %v414, 3
    %v419 = vperm.slane %v415, 3
    %v420 = vmul.f32 %v101, %v418
    %v421 = vmul.f32 %v101, %v419
    %v422 = vadd.f32 %v412, %v420
    %v423 = vadd.f32 %v413, %v421
    %v424 = vadd.f32 %v422, %v116
    %v425 = vadd.f32 %v423, %v116
    %v426 = vmul.f32 %v424, %v123
    %v427 = vmul.f32 %v425, %v123
    %428 = vrot.lane.b32.xlu0 %v424, 17
    %v429 = vpop.permute.xlu0 %428
    %430 = vrot.lane.b32.xlu0 %v425, 17
    %v431 = vpop.permute.xlu0 %430
    %v432 = vsel %vm133, %v429, %v431
    %v433 = vsel %vm133, %v431, %v429
    %v434 = vmul.f32 %v433, %v136
    %v435 = vmul.f32 %v432, %v137
    %v436 = vmul.f32 %v434, %v142
    %v437 = vmul.f32 %v435, %v142
    %v438 = vadd.f32 %v426, %v436
    %v439 = vadd.f32 %v427, %v437
    %440 = vrot.lane.b32.xlu0 %v424, 16
    %v441 = vpop.permute.xlu0 %440
    %442 = vrot.lane.b32.xlu0 %v425, 16
    %v443 = vpop.permute.xlu0 %442
    %v444 = vsel %vm152, %v441, %v443
    %v445 = vsel %vm152, %v443, %v441
    %v446 = vmul.f32 %v445, %v155
    %v447 = vmul.f32 %v444, %v156
    %v448 = vmul.f32 %v446, %v161
    %v449 = vmul.f32 %v447, %v161
    %v450 = vadd.f32 %v438, %v448
    %v451 = vadd.f32 %v439, %v449
    %452 = vrot.lane.b32.xlu0 %v424, 15
    %v453 = vpop.permute.xlu0 %452
    %454 = vrot.lane.b32.xlu0 %v425, 15
    %v455 = vpop.permute.xlu0 %454
    %v456 = vsel %vm171, %v453, %v455
    %v457 = vsel %vm171, %v455, %v453
    %v458 = vmul.f32 %v457, %v174
    %v459 = vmul.f32 %v456, %v175
    %v460 = vmul.f32 %v458, %v180
    %v461 = vmul.f32 %v459, %v180
    %v462 = vadd.f32 %v450, %v460
    %v463 = vadd.f32 %v451, %v461
    %464 = vrot.lane.b32.xlu0 %v424, 1
    %v465 = vpop.permute.xlu0 %464
    %466 = vrot.lane.b32.xlu0 %v425, 1
    %v467 = vpop.permute.xlu0 %466
    %v468 = vsel %vm190, %v465, %v467
    %v469 = vsel %vm190, %v467, %v465
    %v470 = vmul.f32 %v469, %v193
    %v471 = vmul.f32 %v468, %v194
    %v472 = vmul.f32 %v470, %v199
    %v473 = vmul.f32 %v471, %v199
    %v474 = vadd.f32 %v462, %v472
    %v475 = vadd.f32 %v463, %v473
    %476 = vrot.lane.b32.xlu0 %v424, 127
    %v477 = vpop.permute.xlu0 %476
    %478 = vrot.lane.b32.xlu0 %v425, 127
    %v479 = vpop.permute.xlu0 %478
    %v480 = vsel %vm209, %v477, %v479
    %v481 = vsel %vm209, %v479, %v477
    %v482 = vmul.f32 %v480, %v212
    %v483 = vmul.f32 %v481, %v213
    %v484 = vmul.f32 %v482, %v218
    %v485 = vmul.f32 %v483, %v218
    %v486 = vadd.f32 %v474, %v484
    %v487 = vadd.f32 %v475, %v485
    %488 = vrot.lane.b32.xlu0 %v424, 113
    %v489 = vpop.permute.xlu0 %488
    %490 = vrot.lane.b32.xlu0 %v425, 113
    %v491 = vpop.permute.xlu0 %490
    %v492 = vsel %vm228, %v489, %v491
    %v493 = vsel %vm228, %v491, %v489
    %v494 = vmul.f32 %v492, %v231
    %v495 = vmul.f32 %v493, %v232
    %v496 = vmul.f32 %v494, %v237
    %v497 = vmul.f32 %v495, %v237
    %v498 = vadd.f32 %v486, %v496
    %v499 = vadd.f32 %v487, %v497
    %500 = vrot.lane.b32.xlu0 %v424, 112
    %v501 = vpop.permute.xlu0 %500
    %502 = vrot.lane.b32.xlu0 %v425, 112
    %v503 = vpop.permute.xlu0 %502
    %v504 = vsel %vm247, %v501, %v503
    %v505 = vsel %vm247, %v503, %v501
    %v506 = vmul.f32 %v504, %v250
    %v507 = vmul.f32 %v505, %v251
    %v508 = vmul.f32 %v506, %v256
    %v509 = vmul.f32 %v507, %v256
    %v510 = vadd.f32 %v498, %v508
    %v511 = vadd.f32 %v499, %v509
    %512 = vrot.lane.b32.xlu0 %v424, 111
    %v513 = vpop.permute.xlu0 %512
    %514 = vrot.lane.b32.xlu0 %v425, 111
    %v515 = vpop.permute.xlu0 %514
    %v516 = vsel %vm266, %v513, %v515
    %v517 = vsel %vm266, %v515, %v513
    %v518 = vmul.f32 %v516, %v269
    %v519 = vmul.f32 %v517, %v270
    %v520 = vmul.f32 %v518, %v275
    %v521 = vmul.f32 %v519, %v275
    %v522 = vadd.f32 %v510, %v520
    %v523 = vadd.f32 %v511, %v521
    %v524 = vadd.f32 %v522, %v284
    %v525 = vadd.f32 %v523, %v284
    %v526 = vmax.f32 %v524, 0.0
    %v527 = vmax.f32 %v525, 0.0
    %v528 = vperm.slane %v526, 0
    %v529 = vperm.slane %v527, 0
    %v530 = vmul.f32 %v293, %v528
    %v531 = vmul.f32 %v293, %v529
    %v532 = vperm.slane %v526, 1
    %v533 = vperm.slane %v527, 1
    %v534 = vmul.f32 %v301, %v532
    %v535 = vmul.f32 %v301, %v533
    %v536 = vadd.f32 %v530, %v534
    %v537 = vadd.f32 %v531, %v535
    %v538 = vperm.slane %v526, 2
    %v539 = vperm.slane %v527, 2
    %v540 = vmul.f32 %v311, %v538
    %v541 = vmul.f32 %v311, %v539
    %v542 = vadd.f32 %v536, %v540
    %v543 = vadd.f32 %v537, %v541
    %v544 = vperm.slane %v526, 3
    %v545 = vperm.slane %v527, 3
    %v546 = vmul.f32 %v321, %v544
    %v547 = vmul.f32 %v321, %v545
    %v548 = vadd.f32 %v542, %v546
    %v549 = vadd.f32 %v543, %v547
    %v550 = vperm.slane %v526, 4
    %v551 = vperm.slane %v527, 4
    %v552 = vmul.f32 %v331, %v550
    %v553 = vmul.f32 %v331, %v551
    %v554 = vadd.f32 %v548, %v552
    %v555 = vadd.f32 %v549, %v553
    %v556 = vperm.slane %v526, 5
    %v557 = vperm.slane %v527, 5
    %v558 = vmul.f32 %v341, %v556
    %v559 = vmul.f32 %v341, %v557
    %v560 = vadd.f32 %v554, %v558
    %v561 = vadd.f32 %v555, %v559
    %v562 = vperm.slane %v526, 6
    %v563 = vperm.slane %v527, 6
    %v564 = vmul.f32 %v351, %v562
    %v565 = vmul.f32 %v351, %v563
    %v566 = vadd.f32 %v560, %v564
    %v567 = vadd.f32 %v561, %v565
    %v568 = vperm.slane %v526, 7
    %v569 = vperm.slane %v527, 7
    %v570 = vmul.f32 %v361, %v568
    %v571 = vmul.f32 %v361, %v569
    %v572 = vadd.f32 %v566, %v570
    %v573 = vadd.f32 %v567, %v571
    %v574 = vadd.f32 %v572, %v372
    %v575 = vadd.f32 %v573, %v372
    %v578 = vrot.slane %v575, 4
    %v579 = vsel %vm379, %v574, %v578
    %s581 = scalar_lea.vmem [#allocation5], 8
    %582 = vst [vmem:[%s581] sm:$0xff] %v579
    // Predicated region
    $region38: #{tpu_custom_call.1} parent=1 // pred_check
      _
    $region39: #{tpu_custom_call.1} parent=1 // pred_check_branch
      %584 = sbr.rel (0) target = $region41
    $region40: #{tpu_custom_call.1} parent=1 // pred_region
      %586 = vsyncadd [#allocation4], 0
      %s587 = sshll.u32 [#allocation5], 4
      %s588 = int_to_ptr.vmem [resolvable:$true] %s587
      %s589 = sshll.u32 %s8, 4
      %s590 = int_to_ptr.hbm [resolvable:$true] %s589
      %595 = dma.vmem_to_hbm [thread:$0]  %s588, 256, %s590, [#allocation4], 128, 128, 8
    $region41: #{tpu_custom_call.1} parent=1 // pred_fallthru
      _
    // Predicated region
    $region42: #{tpu_custom_call.1} parent=1 // pred_check
      _
    $region43: #{tpu_custom_call.1} parent=1 // pred_check_branch
      %597 = sbr.rel (0) target = $region45
    $region44: #{tpu_custom_call.1} parent=1 // pred_region
      %599 = dma.done [#allocation4], 256
    $region45: #{tpu_custom_call.1} parent=1 // pred_fallthru
      _
    %600 = vsyncpa [#allocation3], 1
    %601 = vsyncpa [#allocation4], 1

</llo_original>
